<compile_context>
chip_gen: v6e
topology: v6e:2x2x1
jax: 0.10.0
libtpu: 0.0.40
codegen_flags: <defaults>
</compile_context>

<pallas_src>
import jax
import jax.numpy as jnp
import numpy as np
from jax.experimental import pallas as pl
from jax.experimental.pallas import tpu as pltpu

SLOWFAST_ALPHA = 4


def _slow_indices(t: int, alpha: int = SLOWFAST_ALPHA):
    """torch.linspace(0, t-1, t // alpha).long() -> truncation toward zero."""
    n = t // alpha
    if n <= 0:
        return ()
    lin = np.linspace(0.0, float(t - 1), num=n)
    return tuple(int(v) for v in lin.astype(np.int64))


def _make_gather_kernel(indices):
    """Build a pure-DMA kernel gathering the (static) temporal indices."""
    indices = tuple(int(t) for t in indices)

    def kernel(x_hbm, o_hbm, sems):
        # x_hbm: (C, T, H*W) in HBM, o_hbm: (C, T_slow, H*W) in HBM.
        # Issue every HBM->HBM copy up front (they overlap on the DMA engine),
        # then wait on all of them.  Indices are static -> free ref views.
        copies = []
        for i, t in enumerate(indices):
            cp = pltpu.make_async_copy(
                x_hbm.at[:, t:t + 1],   # (C, 1, H*W) source view
                o_hbm.at[:, i:i + 1],   # (C, 1, H*W) destination view
                sems.at[i],
            )
            cp.start()
            copies.append(cp)
        for cp in copies:
            cp.wait()

    return kernel


def temporal_index_select(frames: jnp.ndarray, indices) -> jnp.ndarray:
    """Gather frames[:, indices, :, :] via concurrent HBM->HBM DMAs.

    frames:  (C, T, H, W)
    indices: tuple of static Python ints (temporal indices), len == T_slow
    """
    C, T, H, W = frames.shape
    T_slow = len(indices)
    if T_slow == 0:
        # Degenerate case (T < alpha): empty slow pathway, no kernel launch.
        return jnp.zeros((C, 0, H, W), dtype=frames.dtype)

    # Free, contiguous reshape: trailing dim becomes the lane-dense H*W slab.
    x_flat = frames.reshape(C, T, H * W)

    out_flat = pl.pallas_call(
        _make_gather_kernel(indices),
        out_shape=jax.ShapeDtypeStruct((C, T_slow, H * W), frames.dtype),
        in_specs=[pl.BlockSpec(memory_space=pl.ANY)],
        out_specs=pl.BlockSpec(memory_space=pl.ANY),
        scratch_shapes=[pltpu.SemaphoreType.DMA((T_slow,))],
    )(x_flat)

    return out_flat.reshape(C, T_slow, H, W)


def pack_pathway(frames: jnp.ndarray):
    """JAX/Pallas equivalent of PackPathway.forward.

    frames: (C, T, H, W). Returns [slow_pathway, fast_pathway].
    """
    C, T, H, W = frames.shape
    indices = _slow_indices(T)
    # TODO(synk): if the downstream model accepts bf16/uint8 frames, carrying a
    # narrower dtype through this op halves HBM traffic (pure roofline win).
    fast_pathway = frames
    slow_pathway = temporal_index_select(frames, indices)
    return [slow_pathway, fast_pathway]


if __name__ == "__main__":
    key = jax.random.PRNGKey(0)
    C, T, H, W = 3, 16, 16, 16  # small clip: 3 channels, 16 frames, 16x16
    frames = jax.random.normal(key, (C, T, H, W), dtype=jnp.float32)

    slow, fast = pack_pathway(frames)
    slow = jax.block_until_ready(slow)
    fast = jax.block_until_ready(fast)

    # Reference check (same semantics as torch.index_select + torch.linspace.long()).
    n_slow = T // SLOWFAST_ALPHA
    ref_idx = np.linspace(0.0, float(T - 1), num=n_slow).astype(np.int64)
    ref_slow = jnp.take(frames, jnp.asarray(ref_idx), axis=1)

    assert slow.shape == (C, n_slow, H, W), slow.shape
    assert fast.shape == (C, T, H, W), fast.shape
    np.testing.assert_allclose(np.asarray(slow), np.asarray(ref_slow), rtol=0, atol=0)
    np.testing.assert_allclose(np.asarray(fast), np.asarray(frames), rtol=0, atol=0)

    print("KERNEL_OK")
</pallas_src>

<mosaic_0001>
module attributes {stable_mosaic.version = 11 : i64} {
  func.func @kernel(%arg0: memref<3x16x256xf32, #tpu.memory_space<any>>, %arg1: memref<3x4x256xf32, #tpu.memory_space<any>>, %arg2: memref<4x!tpu.dma_semaphore, #tpu.memory_space<semaphore_mem>>) attributes {dimension_semantics = [], scalar_prefetch = 0 : i64, scratch_operands = 1 : i64, tpu.core_type = #tpu.core_type<tc>} {
    %c0_i32 = arith.constant 0 : i32
    %c0_i32_0 = arith.constant 0 : i32
    %c0_i32_1 = arith.constant 0 : i32
    %c0_i32_2 = arith.constant 0 : i32
    %0 = tpu.memref_slice %arg0[%c0_i32_0, %c0_i32_1, %c0_i32_2] : memref<3x16x256xf32, #tpu.memory_space<any>> -> memref<3x1x256xf32, #tpu.memory_space<any>>
    %c0_i32_3 = arith.constant 0 : i32
    %c0_i32_4 = arith.constant 0 : i32
    %c0_i32_5 = arith.constant 0 : i32
    %1 = tpu.memref_slice %arg1[%c0_i32_3, %c0_i32_4, %c0_i32_5] : memref<3x4x256xf32, #tpu.memory_space<any>> -> memref<3x1x256xf32, #tpu.memory_space<any>>
    %2 = tpu.memref_slice %arg2[%c0_i32] : memref<4x!tpu.dma_semaphore, #tpu.memory_space<semaphore_mem>> -> memref<1x!tpu.dma_semaphore, #tpu.memory_space<semaphore_mem>>
    %3 = tpu.memref_squeeze %2 : memref<1x!tpu.dma_semaphore, #tpu.memory_space<semaphore_mem>> -> memref<!tpu.dma_semaphore, #tpu.memory_space<semaphore_mem>>
    tpu.enqueue_dma source(%0 : memref<3x1x256xf32, #tpu.memory_space<any>>) target(%1 : memref<3x1x256xf32, #tpu.memory_space<any>>) target_semaphore(%3 : memref<!tpu.dma_semaphore, #tpu.memory_space<semaphore_mem>>)
    %c1_i32 = arith.constant 1 : i32
    %c0_i32_6 = arith.constant 0 : i32
    %c5_i32 = arith.constant 5 : i32
    %c0_i32_7 = arith.constant 0 : i32
    %4 = tpu.memref_slice %arg0[%c0_i32_6, %c5_i32, %c0_i32_7] : memref<3x16x256xf32, #tpu.memory_space<any>> -> memref<3x1x256xf32, #tpu.memory_space<any>>
    %c0_i32_8 = arith.constant 0 : i32
    %c1_i32_9 = arith.constant 1 : i32
    %c0_i32_10 = arith.constant 0 : i32
    %5 = tpu.memref_slice %arg1[%c0_i32_8, %c1_i32_9, %c0_i32_10] : memref<3x4x256xf32, #tpu.memory_space<any>> -> memref<3x1x256xf32, #tpu.memory_space<any>>
    %6 = tpu.memref_slice %arg2[%c1_i32] : memref<4x!tpu.dma_semaphore, #tpu.memory_space<semaphore_mem>> -> memref<1x!tpu.dma_semaphore, #tpu.memory_space<semaphore_mem>>
    %7 = tpu.memref_squeeze %6 : memref<1x!tpu.dma_semaphore, #tpu.memory_space<semaphore_mem>> -> memref<!tpu.dma_semaphore, #tpu.memory_space<semaphore_mem>>
    tpu.enqueue_dma source(%4 : memref<3x1x256xf32, #tpu.memory_space<any>>) target(%5 : memref<3x1x256xf32, #tpu.memory_space<any>>) target_semaphore(%7 : memref<!tpu.dma_semaphore, #tpu.memory_space<semaphore_mem>>)
    %c2_i32 = arith.constant 2 : i32
    %c0_i32_11 = arith.constant 0 : i32
    %c10_i32 = arith.constant 10 : i32
    %c0_i32_12 = arith.constant 0 : i32
    %8 = tpu.memref_slice %arg0[%c0_i32_11, %c10_i32, %c0_i32_12] : memref<3x16x256xf32, #tpu.memory_space<any>> -> memref<3x1x256xf32, #tpu.memory_space<any>>
    %c0_i32_13 = arith.constant 0 : i32
    %c2_i32_14 = arith.constant 2 : i32
    %c0_i32_15 = arith.constant 0 : i32
    %9 = tpu.memref_slice %arg1[%c0_i32_13, %c2_i32_14, %c0_i32_15] : memref<3x4x256xf32, #tpu.memory_space<any>> -> memref<3x1x256xf32, #tpu.memory_space<any>>
    %10 = tpu.memref_slice %arg2[%c2_i32] : memref<4x!tpu.dma_semaphore, #tpu.memory_space<semaphore_mem>> -> memref<1x!tpu.dma_semaphore, #tpu.memory_space<semaphore_mem>>
    %11 = tpu.memref_squeeze %10 : memref<1x!tpu.dma_semaphore, #tpu.memory_space<semaphore_mem>> -> memref<!tpu.dma_semaphore, #tpu.memory_space<semaphore_mem>>
    tpu.enqueue_dma source(%8 : memref<3x1x256xf32, #tpu.memory_space<any>>) target(%9 : memref<3x1x256xf32, #tpu.memory_space<any>>) target_semaphore(%11 : memref<!tpu.dma_semaphore, #tpu.memory_space<semaphore_mem>>)
    %c3_i32 = arith.constant 3 : i32
    %c0_i32_16 = arith.constant 0 : i32
    %c15_i32 = arith.constant 15 : i32
    %c0_i32_17 = arith.constant 0 : i32
    %12 = tpu.memref_slice %arg0[%c0_i32_16, %c15_i32, %c0_i32_17] : memref<3x16x256xf32, #tpu.memory_space<any>> -> memref<3x1x256xf32, #tpu.memory_space<any>>
    %c0_i32_18 = arith.constant 0 : i32
    %c3_i32_19 = arith.constant 3 : i32
    %c0_i32_20 = arith.constant 0 : i32
    %13 = tpu.memref_slice %arg1[%c0_i32_18, %c3_i32_19, %c0_i32_20] : memref<3x4x256xf32, #tpu.memory_space<any>> -> memref<3x1x256xf32, #tpu.memory_space<any>>
    %14 = tpu.memref_slice %arg2[%c3_i32] : memref<4x!tpu.dma_semaphore, #tpu.memory_space<semaphore_mem>> -> memref<1x!tpu.dma_semaphore, #tpu.memory_space<semaphore_mem>>
    %15 = tpu.memref_squeeze %14 : memref<1x!tpu.dma_semaphore, #tpu.memory_space<semaphore_mem>> -> memref<!tpu.dma_semaphore, #tpu.memory_space<semaphore_mem>>
    tpu.enqueue_dma source(%12 : memref<3x1x256xf32, #tpu.memory_space<any>>) target(%13 : memref<3x1x256xf32, #tpu.memory_space<any>>) target_semaphore(%15 : memref<!tpu.dma_semaphore, #tpu.memory_space<semaphore_mem>>)
    %c0_i32_21 = arith.constant 0 : i32
    %c0_i32_22 = arith.constant 0 : i32
    %c0_i32_23 = arith.constant 0 : i32
    %c0_i32_24 = arith.constant 0 : i32
    %16 = tpu.memref_slice %arg0[%c0_i32_22, %c0_i32_23, %c0_i32_24] : memref<3x16x256xf32, #tpu.memory_space<any>> -> memref<3x1x256xf32, #tpu.memory_space<any>>
    %c0_i32_25 = arith.constant 0 : i32
    %c0_i32_26 = arith.constant 0 : i32
    %c0_i32_27 = arith.constant 0 : i32
    %17 = tpu.memref_slice %arg1[%c0_i32_25, %c0_i32_26, %c0_i32_27] : memref<3x4x256xf32, #tpu.memory_space<any>> -> memref<3x1x256xf32, #tpu.memory_space<any>>
    %18 = tpu.memref_slice %arg2[%c0_i32_21] : memref<4x!tpu.dma_semaphore, #tpu.memory_space<semaphore_mem>> -> memref<1x!tpu.dma_semaphore, #tpu.memory_space<semaphore_mem>>
    %19 = tpu.memref_squeeze %18 : memref<1x!tpu.dma_semaphore, #tpu.memory_space<semaphore_mem>> -> memref<!tpu.dma_semaphore, #tpu.memory_space<semaphore_mem>>
    tpu.wait_dma2 semaphore(%19 : memref<!tpu.dma_semaphore, #tpu.memory_space<semaphore_mem>>) src(%16 : memref<3x1x256xf32, #tpu.memory_space<any>>) dst(%17 : memref<3x1x256xf32, #tpu.memory_space<any>>)
    %c1_i32_28 = arith.constant 1 : i32
    %c0_i32_29 = arith.constant 0 : i32
    %c5_i32_30 = arith.constant 5 : i32
    %c0_i32_31 = arith.constant 0 : i32
    %20 = tpu.memref_slice %arg0[%c0_i32_29, %c5_i32_30, %c0_i32_31] : memref<3x16x256xf32, #tpu.memory_space<any>> -> memref<3x1x256xf32, #tpu.memory_space<any>>
    %c0_i32_32 = arith.constant 0 : i32
    %c1_i32_33 = arith.constant 1 : i32
    %c0_i32_34 = arith.constant 0 : i32
    %21 = tpu.memref_slice %arg1[%c0_i32_32, %c1_i32_33, %c0_i32_34] : memref<3x4x256xf32, #tpu.memory_space<any>> -> memref<3x1x256xf32, #tpu.memory_space<any>>
    %22 = tpu.memref_slice %arg2[%c1_i32_28] : memref<4x!tpu.dma_semaphore, #tpu.memory_space<semaphore_mem>> -> memref<1x!tpu.dma_semaphore, #tpu.memory_space<semaphore_mem>>
    %23 = tpu.memref_squeeze %22 : memref<1x!tpu.dma_semaphore, #tpu.memory_space<semaphore_mem>> -> memref<!tpu.dma_semaphore, #tpu.memory_space<semaphore_mem>>
    tpu.wait_dma2 semaphore(%23 : memref<!tpu.dma_semaphore, #tpu.memory_space<semaphore_mem>>) src(%20 : memref<3x1x256xf32, #tpu.memory_space<any>>) dst(%21 : memref<3x1x256xf32, #tpu.memory_space<any>>)
    %c2_i32_35 = arith.constant 2 : i32
    %c0_i32_36 = arith.constant 0 : i32
    %c10_i32_37 = arith.constant 10 : i32
    %c0_i32_38 = arith.constant 0 : i32
    %24 = tpu.memref_slice %arg0[%c0_i32_36, %c10_i32_37, %c0_i32_38] : memref<3x16x256xf32, #tpu.memory_space<any>> -> memref<3x1x256xf32, #tpu.memory_space<any>>
    %c0_i32_39 = arith.constant 0 : i32
    %c2_i32_40 = arith.constant 2 : i32
    %c0_i32_41 = arith.constant 0 : i32
    %25 = tpu.memref_slice %arg1[%c0_i32_39, %c2_i32_40, %c0_i32_41] : memref<3x4x256xf32, #tpu.memory_space<any>> -> memref<3x1x256xf32, #tpu.memory_space<any>>
    %26 = tpu.memref_slice %arg2[%c2_i32_35] : memref<4x!tpu.dma_semaphore, #tpu.memory_space<semaphore_mem>> -> memref<1x!tpu.dma_semaphore, #tpu.memory_space<semaphore_mem>>
    %27 = tpu.memref_squeeze %26 : memref<1x!tpu.dma_semaphore, #tpu.memory_space<semaphore_mem>> -> memref<!tpu.dma_semaphore, #tpu.memory_space<semaphore_mem>>
    tpu.wait_dma2 semaphore(%27 : memref<!tpu.dma_semaphore, #tpu.memory_space<semaphore_mem>>) src(%24 : memref<3x1x256xf32, #tpu.memory_space<any>>) dst(%25 : memref<3x1x256xf32, #tpu.memory_space<any>>)
    %c3_i32_42 = arith.constant 3 : i32
    %c0_i32_43 = arith.constant 0 : i32
    %c15_i32_44 = arith.constant 15 : i32
    %c0_i32_45 = arith.constant 0 : i32
    %28 = tpu.memref_slice %arg0[%c0_i32_43, %c15_i32_44, %c0_i32_45] : memref<3x16x256xf32, #tpu.memory_space<any>> -> memref<3x1x256xf32, #tpu.memory_space<any>>
    %c0_i32_46 = arith.constant 0 : i32
    %c3_i32_47 = arith.constant 3 : i32
    %c0_i32_48 = arith.constant 0 : i32
    %29 = tpu.memref_slice %arg1[%c0_i32_46, %c3_i32_47, %c0_i32_48] : memref<3x4x256xf32, #tpu.memory_space<any>> -> memref<3x1x256xf32, #tpu.memory_space<any>>
    %30 = tpu.memref_slice %arg2[%c3_i32_42] : memref<4x!tpu.dma_semaphore, #tpu.memory_space<semaphore_mem>> -> memref<1x!tpu.dma_semaphore, #tpu.memory_space<semaphore_mem>>
    %31 = tpu.memref_squeeze %30 : memref<1x!tpu.dma_semaphore, #tpu.memory_space<semaphore_mem>> -> memref<!tpu.dma_semaphore, #tpu.memory_space<semaphore_mem>>
    tpu.wait_dma2 semaphore(%31 : memref<!tpu.dma_semaphore, #tpu.memory_space<semaphore_mem>>) src(%28 : memref<3x1x256xf32, #tpu.memory_space<any>>) dst(%29 : memref<3x1x256xf32, #tpu.memory_space<any>>)
    return
  }
}

</mosaic_0001>

<llo_original>
// kernel: tpu_custom_call.1
$region0: #{tpu_custom_call.1}
  #allocation0 [shape = 'u32[]', space=smem, size = 0x4, offset = 0x4, fixed_abs, tag = 'smem constant byte address 0x4 - core index']
  #allocation1 [shape = 'u32[144,128]{1,0:T(1,128)}', space=vmem, size = 0x12000, scoped, tag = 'internal scratch']
  #allocation2 [shape = 's32[4]{0}', space=sflag, size = 0x10, scoped, tag = 'scratch operand']
  #allocation3 [shape = 's32[]', space=sflag, size = 0x4, offset = 0, fixed_abs, tag = 'sflag constant byte address 0x0 - dummy sync flag']
  #allocation5 [shape = 's32[]', space=sflag, size = 0x4, offset = 0, fixed_abs, tag = 'sflag constant byte address 0x0 - dummy sync flag']
  #allocation7 [shape = 's32[]', space=sflag, size = 0x4, offset = 0, fixed_abs, tag = 'sflag constant byte address 0x0 - dummy sync flag']
  #allocation9 [shape = 's32[]', space=sflag, size = 0x4, offset = 0, fixed_abs, tag = 'sflag constant byte address 0x0 - dummy sync flag']
  %s0 = inlined_call_operand.hbm [shape: f32[3,16,256], index: 0, kind: input, shape index: {}]
  %s1 = inlined_call_operand.hbm [shape: f32[3,4,256], index: 1, kind: output, shape index: {}]
  %s2 = sld [smem:[#allocation0]]
  $region2: #{tpu_custom_call.1} parent=0
    _
  %s4 = ssub.s32 1, %s2
  %s5 = scalar_select 0, %s4, %s2
  $region1: #{tpu_custom_call.1} parent=0
    #allocation4 [shape = 'u32[6]{0}', space=smem, size = 0x18, scoped, tag = 'DMA stride descriptor']
    #allocation6 [shape = 'u32[6]{0}', space=smem, size = 0x18, scoped, tag = 'DMA stride descriptor']
    #allocation8 [shape = 'u32[6]{0}', space=smem, size = 0x18, scoped, tag = 'DMA stride descriptor']
    #allocation10 [shape = 'u32[6]{0}', space=smem, size = 0x18, scoped, tag = 'DMA stride descriptor']
    %s7 = sshll.u32 1, 14
    %s8 = sxor.u32 4294967295, %s7
    %12 = sst [smem:[#allocation4]] 512
    %s13 = scalar_lea.smem [#allocation4], 1
    %14 = sst [smem:[%s13]] 128
    %s15 = scalar_lea.smem [#allocation4], 2
    %16 = sst [smem:[%s15]] 2
    %s17 = scalar_lea.smem [#allocation4], 3
    %18 = sst [smem:[%s17]] 128
    %s19 = scalar_lea.smem [#allocation4], 4
    %20 = sst [smem:[%s19]] 64
    %s21 = scalar_lea.smem [#allocation4], 5
    %22 = sst [smem:[%s21]] 1
    %24 = dma.general %s0, 96, %s1, [#allocation2], 131072, [#allocation4], 0, 0
    %s25 = scalar_lea.hbm %s0, 80
    %s26 = scalar_lea.hbm %s1, 16
    %s27 = scalar_lea.sflag [#allocation2], 1
    %s29 = sshll.u32 1, 14
    %s30 = sxor.u32 4294967295, %s29
    %34 = sst [smem:[#allocation6]] 512
    %s35 = scalar_lea.smem [#allocation6], 1
    %36 = sst [smem:[%s35]] 128
    %s37 = scalar_lea.smem [#allocation6], 2
    %38 = sst [smem:[%s37]] 2
    %s39 = scalar_lea.smem [#allocation6], 3
    %40 = sst [smem:[%s39]] 128
    %s41 = scalar_lea.smem [#allocation6], 4
    %42 = sst [smem:[%s41]] 64
    %s43 = scalar_lea.smem [#allocation6], 5
    %44 = sst [smem:[%s43]] 1
    %46 = dma.general %s25, 96, %s26, %s27, 131072, [#allocation6], 0, 0
    %s47 = scalar_lea.hbm %s0, 288
    %s48 = scalar_lea.hbm %s1, 32
    %s49 = scalar_lea.sflag [#allocation2], 2
    %s51 = sshll.u32 1, 14
    %s52 = sxor.u32 4294967295, %s51
    %56 = sst [smem:[#allocation8]] 512
    %s57 = scalar_lea.smem [#allocation8], 1
    %58 = sst [smem:[%s57]] 128
    %s59 = scalar_lea.smem [#allocation8], 2
    %60 = sst [smem:[%s59]] 2
    %s61 = scalar_lea.smem [#allocation8], 3
    %62 = sst [smem:[%s61]] 128
    %s63 = scalar_lea.smem [#allocation8], 4
    %64 = sst [smem:[%s63]] 64
    %s65 = scalar_lea.smem [#allocation8], 5
    %66 = sst [smem:[%s65]] 1
    %68 = dma.general %s47, 96, %s48, %s49, 131072, [#allocation8], 0, 0
    %s69 = scalar_lea.hbm %s0, 368
    %s70 = scalar_lea.hbm %s1, 48
    %s71 = scalar_lea.sflag [#allocation2], 3
    %s73 = sshll.u32 1, 14
    %s74 = sxor.u32 4294967295, %s73
    %78 = sst [smem:[#allocation10]] 512
    %s79 = scalar_lea.smem [#allocation10], 1
    %80 = sst [smem:[%s79]] 128
    %s81 = scalar_lea.smem [#allocation10], 2
    %82 = sst [smem:[%s81]] 2
    %s83 = scalar_lea.smem [#allocation10], 3
    %84 = sst [smem:[%s83]] 128
    %s85 = scalar_lea.smem [#allocation10], 4
    %86 = sst [smem:[%s85]] 64
    %s87 = scalar_lea.smem [#allocation10], 5
    %88 = sst [smem:[%s87]] 1
    %90 = dma.general %s69, 96, %s70, %s71, 131072, [#allocation10], 0, 0
    %s91 = smul.u32 3, 1
    %s92 = smul.u32 %s91, 2
    %s93 = sshll.u32 %s92, 4
    %94 = dma.done [#allocation2], %s93
    %s95 = sshll.u32 %s92, 4
    %96 = dma.done %s27, %s95
    %s97 = sshll.u32 %s92, 4
    %98 = dma.done %s49, %s97
    %s99 = sshll.u32 %s92, 4
    %100 = dma.done %s71, %s99
  %101 = vsyncmov [#allocation2]
  %s102 = vpop.sfrf %101
  %p103 = scmp.eq.s32.totalorder %s102, 0
  %p104 = pneg %p103
  %106 = shalt.err (%p104)
  %s107 = scalar_lea.sflag [#allocation2], 1
  %108 = vsyncmov %s107
  %s109 = vpop.sfrf %108
  %p110 = scmp.eq.s32.totalorder %s109, 0
  %p111 = pneg %p110
  %113 = shalt.err (%p111)
  %s114 = scalar_lea.sflag [#allocation2], 2
  %115 = vsyncmov %s114
  %s116 = vpop.sfrf %115
  %p117 = scmp.eq.s32.totalorder %s116, 0
  %p118 = pneg %p117
  %120 = shalt.err (%p118)
  %s121 = scalar_lea.sflag [#allocation2], 3
  %122 = vsyncmov %s121
  %s123 = vpop.sfrf %122
  %p124 = scmp.eq.s32.totalorder %s123, 0
  %p125 = pneg %p124
  %127 = shalt.err (%p125)

</llo_original>
